<compile_context>
chip_gen: v5e
topology: v5e:2x2
jax: 0.10.0
libtpu: 0.0.40
codegen_flags: <defaults>
</compile_context>

<pallas_src>
import math

import jax
import jax.numpy as jnp
from jax.experimental import pallas as pl
from jax.experimental.pallas import tpu as pltpu

# ---------------- config ----------------
HIDDEN = 32
N_EXPERTS = 64
TOP_K = 4
ROUTED_SCALING = 2.0
NORM_TOPK_PROB = False
MAX_EXPERT = 0        # self.max_expert (never updated in the module)
TARGET_VALUE = 64     # hard-coded in forward


def _round_up(x, m):
    return (x + m - 1) // m * m


def _gate_kernel(x_ref, w_ref, rand_ref, idx_ref, wgt_ref):
    # x: (TILE_N, H) tile, w: (E, H) resident, rand: (TILE_N, TOP_K) 0/1 ints.
    x = x_ref[...].astype(jnp.bfloat16)
    w = w_ref[...].astype(jnp.bfloat16)

    # logits = F.linear(x, w) = x @ w.T  (bf16 inputs, f32 accumulation on MXU)
    logits = jax.lax.dot_general(
        x, w, (((1,), (1,)), ((), ())), preferred_element_type=jnp.float32
    )  # (TILE_N, E)

    n, n_exp = logits.shape
    m = jnp.max(logits, axis=-1, keepdims=True)       # row max, reused for k=0
    e = jnp.exp(logits - m)                            # full width: needed for denom
    denom = jnp.sum(e, axis=-1, keepdims=True)         # (TILE_N, 1)

    col_ids = jax.lax.broadcasted_iota(jnp.int32, (n, n_exp), 1)
    k_ids = jax.lax.broadcasted_iota(jnp.int32, (n, TOP_K), 1)

    topk_l = jnp.zeros((n, TOP_K), jnp.float32)
    topk_i = jnp.zeros((n, TOP_K), jnp.int32)
    work = logits
    mx = m
    # greedy top-k via iterative argmax (TOP_K is small & static)
    for k in range(TOP_K):
        if k > 0:
            mx = jnp.max(work, axis=-1, keepdims=True)               # (TILE_N, 1)
        idx = jnp.min(jnp.where(work == mx, col_ids, n_exp), axis=-1,
                      keepdims=True)                                  # (TILE_N, 1)
        topk_l = jnp.where(k_ids == k, mx, topk_l)
        topk_i = jnp.where(k_ids == k, idx, topk_i)
        work = jnp.where(col_ids == idx, -jnp.inf, work)

    # softmax weights only for the selected experts: exp(l - m) / denom on (TILE_N, K)
    topk_w = jnp.exp(topk_l - m) / denom

    if TOP_K > 1 and NORM_TOPK_PROB:
        topk_w = topk_w / (jnp.sum(topk_w, axis=-1, keepdims=True) + 1e-20)
    else:
        topk_w = topk_w * ROUTED_SCALING

    # "Duplicate" replacement: wherever topk_idx is max_expert(0) or 64, replace
    # with a random choice between the two (torch.randint(0, 2, ...) semantics).
    rand = rand_ref[...]
    repl = jnp.where(rand == 0, MAX_EXPERT, TARGET_VALUE).astype(jnp.int32)
    mask = (topk_i == MAX_EXPERT) | (topk_i == TARGET_VALUE)

    idx_ref[...] = jnp.where(mask, repl, topk_i)
    wgt_ref[...] = topk_w


def duplicate_moe_gate(hidden_states, weight, seed, tile_n=1024):
    """hidden_states: (bsz, seq, H) float32; weight: (E, H) float32."""
    bsz, seq_len, h = hidden_states.shape
    n = bsz * seq_len
    x = hidden_states.reshape(n, h)

    # Row tiling: tile_n multiple of 8 (sublane), pad N so the grid divides evenly.
    tile_n = max(8, min(tile_n, _round_up(n, 8)))
    n_pad = _round_up(n, tile_n)
    if n_pad != n:
        x = jnp.pad(x, ((0, n_pad - n), (0, 0)))

    # Random 0/1 choices, mirrors torch.randint(0, 2, size=topk_idx.shape).
    rand = jax.random.randint(jax.random.PRNGKey(seed), (n_pad, TOP_K), 0, 2,
                              dtype=jnp.int32)

    grid = (n_pad // tile_n,)
    topk_idx, topk_weight = pl.pallas_call(
        _gate_kernel,
        grid=grid,
        in_specs=[
            pl.BlockSpec((tile_n, h), lambda i: (i, 0)),            # x tile (streamed)
            pl.BlockSpec((N_EXPERTS, h), lambda i: (0, 0)),         # weight (resident)
            pl.BlockSpec((tile_n, TOP_K), lambda i: (i, 0)),        # random bits tile
        ],
        out_specs=(
            pl.BlockSpec((tile_n, TOP_K), lambda i: (i, 0)),
            pl.BlockSpec((tile_n, TOP_K), lambda i: (i, 0)),
        ),
        out_shape=(
            jax.ShapeDtypeStruct((n_pad, TOP_K), jnp.int32),
            jax.ShapeDtypeStruct((n_pad, TOP_K), jnp.float32),
        ),
        compiler_params=pltpu.CompilerParams(
            dimension_semantics=("parallel",),
            vmem_limit_bytes=32 * 1024 * 1024,
        ),
    )(x, weight, rand)

    # Drop the padded rows (they computed garbage that never aliases valid output).
    topk_idx = topk_idx[:n]
    topk_weight = topk_weight[:n]

    aux_loss = None  # eval mode / aux_loss_alpha == 0.0
    return topk_idx, topk_weight, aux_loss


if __name__ == "__main__":
    key = jax.random.PRNGKey(0)
    k_x, k_w = jax.random.split(key)

    bsz, seq_len = 2, 8
    x = jax.random.normal(k_x, (bsz, seq_len, HIDDEN), dtype=jnp.float32)

    # kaiming_uniform_(a=sqrt(5)) on (E, H)  =>  U(-1/sqrt(H), 1/sqrt(H))
    bound = 1.0 / math.sqrt(HIDDEN)
    weight = jax.random.uniform(
        k_w, (N_EXPERTS, HIDDEN), dtype=jnp.float32, minval=-bound, maxval=bound
    )

    topk_idx, topk_weight, aux_loss = duplicate_moe_gate(x, weight, seed=1234)
    jax.block_until_ready((topk_idx, topk_weight))

    # ---- pure-JAX reference check (deterministic part, same bf16 matmul path) ----
    xf = x.reshape(-1, HIDDEN)
    logits = jax.lax.dot_general(
        xf.astype(jnp.bfloat16), weight.astype(jnp.bfloat16),
        (((1,), (1,)), ((), ())), preferred_element_type=jnp.float32)
    scores = jax.nn.softmax(logits, axis=-1)
    ref_w, ref_i = jax.lax.top_k(scores, TOP_K)
    ref_w = ref_w * ROUTED_SCALING

    assert topk_idx.shape == (bsz * seq_len, TOP_K)
    assert topk_weight.shape == (bsz * seq_len, TOP_K)
    assert jnp.allclose(topk_weight, ref_w, atol=1e-5, rtol=1e-5), "topk_weight mismatch"
    repl_mask = (ref_i == MAX_EXPERT) | (ref_i == TARGET_VALUE)
    assert bool(jnp.all(jnp.where(repl_mask, True, topk_idx == ref_i))), "topk_idx mismatch"
    assert bool(
        jnp.all(
            jnp.where(repl_mask, (topk_idx == MAX_EXPERT) | (topk_idx == TARGET_VALUE), True)
        )
    ), "replacement values out of {max_expert, 64}"
    assert aux_loss is None

    print("KERNEL_OK")
</pallas_src>

<mosaic_0001>
module attributes {stable_mosaic.version = 11 : i64} {
  func.func @_gate_kernel(%arg0: i32, %arg1: memref<16x32xf32, #tpu.memory_space<vmem>>, %arg2: memref<64x32xf32, #tpu.memory_space<vmem>>, %arg3: memref<16x4xi32, #tpu.memory_space<vmem>>, %arg4: memref<16x4xi32, #tpu.memory_space<vmem>>, %arg5: memref<16x4xf32, #tpu.memory_space<vmem>>) attributes {dimension_semantics = [#tpu.dimension_semantics<parallel>], iteration_bounds = array<i64: 1>, scalar_prefetch = 0 : i64, scratch_operands = 0 : i64, tpu.core_type = #tpu.core_type<tc>, window_params = [{transform_indices = @transform_0, window_bounds = array<i64: 16, 32>}, {pipeline_mode = #tpu.pipeline_mode<synchronous>, transform_indices = @transform_1, window_bounds = array<i64: 64, 32>}, {transform_indices = @transform_2, window_bounds = array<i64: 16, 4>}, {transform_indices = @transform_3, window_bounds = array<i64: 16, 4>}, {transform_indices = @transform_4, window_bounds = array<i64: 16, 4>}]} {
    %c0 = arith.constant 0 : index
    %c0_0 = arith.constant 0 : index
    %0 = vector.load %arg1[%c0, %c0_0] : memref<16x32xf32, #tpu.memory_space<vmem>>, vector<16x32xf32>
    %1 = arith.truncf %0 : vector<16x32xf32> to vector<16x32xbf16>
    %c0_1 = arith.constant 0 : index
    %c0_2 = arith.constant 0 : index
    %2 = vector.load %arg2[%c0_1, %c0_2] : memref<64x32xf32, #tpu.memory_space<vmem>>, vector<64x32xf32>
    %3 = arith.truncf %2 : vector<64x32xf32> to vector<64x32xbf16>
    %cst = arith.constant dense<0.000000e+00> : vector<16x64xf32>
    %4 = tpu.matmul %1, %3, %cst {dimension_numbers = #tpu.dot_dimension_numbers<[1], [1], [0], [0], [0, 0, 1, 0], [], []>} : vector<16x32xbf16>, vector<64x32xbf16>, vector<16x64xf32> -> vector<16x64xf32>
    %cst_3 = arith.constant dense<0xFF800000> : vector<16xf32>
    %5 = vector.multi_reduction <maximumf>, %4, %cst_3 [1] : vector<16x64xf32> to vector<16xf32>
    %6 = vector.shape_cast %5 : vector<16xf32> to vector<16x1xf32>
    %7 = vector.broadcast %6 : vector<16x1xf32> to vector<16x64xf32>
    %8 = arith.subf %4, %7 : vector<16x64xf32>
    %9 = math.exp %8 : vector<16x64xf32>
    %cst_4 = arith.constant dense<0.000000e+00> : vector<16xf32>
    %10 = vector.multi_reduction <add>, %9, %cst_4 [1] : vector<16x64xf32> to vector<16xf32>
    %11 = vector.shape_cast %10 : vector<16xf32> to vector<16x1xf32>
    %12 = tpu.iota {dimensions = array<i32: 1>} : vector<16x64xi32>
    %13 = tpu.iota {dimensions = array<i32: 1>} : vector<16x4xi32>
    %cst_5 = arith.constant 0.000000e+00 : f32
    %14 = vector.broadcast %cst_5 : f32 to vector<16x4xf32>
    %c0_i32 = arith.constant 0 : i32
    %15 = vector.broadcast %c0_i32 : i32 to vector<16x4xi32>
    %16 = vector.broadcast %6 : vector<16x1xf32> to vector<16x64xf32>
    %17 = arith.cmpf oeq, %4, %16 : vector<16x64xf32>
    %c64_i32 = arith.constant 64 : i32
    %18 = vector.broadcast %c64_i32 : i32 to vector<16x64xi32>
    %19 = arith.select %17, %12, %18 : vector<16x64xi1>, vector<16x64xi32>
    %cst_6 = arith.constant dense<2147483647> : vector<16xi32>
    %20 = vector.multi_reduction <minsi>, %19, %cst_6 [1] : vector<16x64xi32> to vector<16xi32>
    %21 = vector.shape_cast %20 : vector<16xi32> to vector<16x1xi32>
    %c0_i32_7 = arith.constant 0 : i32
    %22 = vector.broadcast %c0_i32_7 : i32 to vector<16x4xi32>
    %23 = arith.cmpi eq, %13, %22 : vector<16x4xi32>
    %24 = vector.shape_cast %6 : vector<16x1xf32> to vector<16x1xf32>
    %25 = vector.broadcast %24 : vector<16x1xf32> to vector<16x4xf32>
    %26 = arith.select %23, %25, %14 : vector<16x4xi1>, vector<16x4xf32>
    %c0_i32_8 = arith.constant 0 : i32
    %27 = vector.broadcast %c0_i32_8 : i32 to vector<16x4xi32>
    %28 = arith.cmpi eq, %13, %27 : vector<16x4xi32>
    %29 = vector.shape_cast %21 : vector<16x1xi32> to vector<16x1xi32>
    %30 = vector.broadcast %29 : vector<16x1xi32> to vector<16x4xi32>
    %31 = arith.select %28, %30, %15 : vector<16x4xi1>, vector<16x4xi32>
    %32 = vector.broadcast %21 : vector<16x1xi32> to vector<16x64xi32>
    %33 = arith.cmpi eq, %12, %32 : vector<16x64xi32>
    %cst_9 = arith.constant 0xFF800000 : f32
    %34 = vector.broadcast %cst_9 : f32 to vector<16x64xf32>
    %35 = arith.select %33, %34, %4 : vector<16x64xi1>, vector<16x64xf32>
    %cst_10 = arith.constant dense<0xFF800000> : vector<16xf32>
    %36 = vector.multi_reduction <maximumf>, %35, %cst_10 [1] : vector<16x64xf32> to vector<16xf32>
    %37 = vector.shape_cast %36 : vector<16xf32> to vector<16x1xf32>
    %38 = vector.broadcast %37 : vector<16x1xf32> to vector<16x64xf32>
    %39 = arith.cmpf oeq, %35, %38 : vector<16x64xf32>
    %c64_i32_11 = arith.constant 64 : i32
    %40 = vector.broadcast %c64_i32_11 : i32 to vector<16x64xi32>
    %41 = arith.select %39, %12, %40 : vector<16x64xi1>, vector<16x64xi32>
    %cst_12 = arith.constant dense<2147483647> : vector<16xi32>
    %42 = vector.multi_reduction <minsi>, %41, %cst_12 [1] : vector<16x64xi32> to vector<16xi32>
    %43 = vector.shape_cast %42 : vector<16xi32> to vector<16x1xi32>
    %c1_i32 = arith.constant 1 : i32
    %44 = vector.broadcast %c1_i32 : i32 to vector<16x4xi32>
    %45 = arith.cmpi eq, %13, %44 : vector<16x4xi32>
    %46 = vector.shape_cast %37 : vector<16x1xf32> to vector<16x1xf32>
    %47 = vector.broadcast %46 : vector<16x1xf32> to vector<16x4xf32>
    %48 = arith.select %45, %47, %26 : vector<16x4xi1>, vector<16x4xf32>
    %c1_i32_13 = arith.constant 1 : i32
    %49 = vector.broadcast %c1_i32_13 : i32 to vector<16x4xi32>
    %50 = arith.cmpi eq, %13, %49 : vector<16x4xi32>
    %51 = vector.shape_cast %43 : vector<16x1xi32> to vector<16x1xi32>
    %52 = vector.broadcast %51 : vector<16x1xi32> to vector<16x4xi32>
    %53 = arith.select %50, %52, %31 : vector<16x4xi1>, vector<16x4xi32>
    %54 = vector.broadcast %43 : vector<16x1xi32> to vector<16x64xi32>
    %55 = arith.cmpi eq, %12, %54 : vector<16x64xi32>
    %cst_14 = arith.constant 0xFF800000 : f32
    %56 = vector.broadcast %cst_14 : f32 to vector<16x64xf32>
    %57 = arith.select %55, %56, %35 : vector<16x64xi1>, vector<16x64xf32>
    %cst_15 = arith.constant dense<0xFF800000> : vector<16xf32>
    %58 = vector.multi_reduction <maximumf>, %57, %cst_15 [1] : vector<16x64xf32> to vector<16xf32>
    %59 = vector.shape_cast %58 : vector<16xf32> to vector<16x1xf32>
    %60 = vector.broadcast %59 : vector<16x1xf32> to vector<16x64xf32>
    %61 = arith.cmpf oeq, %57, %60 : vector<16x64xf32>
    %c64_i32_16 = arith.constant 64 : i32
    %62 = vector.broadcast %c64_i32_16 : i32 to vector<16x64xi32>
    %63 = arith.select %61, %12, %62 : vector<16x64xi1>, vector<16x64xi32>
    %cst_17 = arith.constant dense<2147483647> : vector<16xi32>
    %64 = vector.multi_reduction <minsi>, %63, %cst_17 [1] : vector<16x64xi32> to vector<16xi32>
    %65 = vector.shape_cast %64 : vector<16xi32> to vector<16x1xi32>
    %c2_i32 = arith.constant 2 : i32
    %66 = vector.broadcast %c2_i32 : i32 to vector<16x4xi32>
    %67 = arith.cmpi eq, %13, %66 : vector<16x4xi32>
    %68 = vector.shape_cast %59 : vector<16x1xf32> to vector<16x1xf32>
    %69 = vector.broadcast %68 : vector<16x1xf32> to vector<16x4xf32>
    %70 = arith.select %67, %69, %48 : vector<16x4xi1>, vector<16x4xf32>
    %c2_i32_18 = arith.constant 2 : i32
    %71 = vector.broadcast %c2_i32_18 : i32 to vector<16x4xi32>
    %72 = arith.cmpi eq, %13, %71 : vector<16x4xi32>
    %73 = vector.shape_cast %65 : vector<16x1xi32> to vector<16x1xi32>
    %74 = vector.broadcast %73 : vector<16x1xi32> to vector<16x4xi32>
    %75 = arith.select %72, %74, %53 : vector<16x4xi1>, vector<16x4xi32>
    %76 = vector.broadcast %65 : vector<16x1xi32> to vector<16x64xi32>
    %77 = arith.cmpi eq, %12, %76 : vector<16x64xi32>
    %cst_19 = arith.constant 0xFF800000 : f32
    %78 = vector.broadcast %cst_19 : f32 to vector<16x64xf32>
    %79 = arith.select %77, %78, %57 : vector<16x64xi1>, vector<16x64xf32>
    %cst_20 = arith.constant dense<0xFF800000> : vector<16xf32>
    %80 = vector.multi_reduction <maximumf>, %79, %cst_20 [1] : vector<16x64xf32> to vector<16xf32>
    %81 = vector.shape_cast %80 : vector<16xf32> to vector<16x1xf32>
    %82 = vector.broadcast %81 : vector<16x1xf32> to vector<16x64xf32>
    %83 = arith.cmpf oeq, %79, %82 : vector<16x64xf32>
    %c64_i32_21 = arith.constant 64 : i32
    %84 = vector.broadcast %c64_i32_21 : i32 to vector<16x64xi32>
    %85 = arith.select %83, %12, %84 : vector<16x64xi1>, vector<16x64xi32>
    %cst_22 = arith.constant dense<2147483647> : vector<16xi32>
    %86 = vector.multi_reduction <minsi>, %85, %cst_22 [1] : vector<16x64xi32> to vector<16xi32>
    %87 = vector.shape_cast %86 : vector<16xi32> to vector<16x1xi32>
    %c3_i32 = arith.constant 3 : i32
    %88 = vector.broadcast %c3_i32 : i32 to vector<16x4xi32>
    %89 = arith.cmpi eq, %13, %88 : vector<16x4xi32>
    %90 = vector.shape_cast %81 : vector<16x1xf32> to vector<16x1xf32>
    %91 = vector.broadcast %90 : vector<16x1xf32> to vector<16x4xf32>
    %92 = arith.select %89, %91, %70 : vector<16x4xi1>, vector<16x4xf32>
    %c3_i32_23 = arith.constant 3 : i32
    %93 = vector.broadcast %c3_i32_23 : i32 to vector<16x4xi32>
    %94 = arith.cmpi eq, %13, %93 : vector<16x4xi32>
    %95 = vector.shape_cast %87 : vector<16x1xi32> to vector<16x1xi32>
    %96 = vector.broadcast %95 : vector<16x1xi32> to vector<16x4xi32>
    %97 = arith.select %94, %96, %75 : vector<16x4xi1>, vector<16x4xi32>
    %98 = vector.broadcast %6 : vector<16x1xf32> to vector<16x4xf32>
    %99 = arith.subf %92, %98 : vector<16x4xf32>
    %100 = math.exp %99 : vector<16x4xf32>
    %101 = vector.broadcast %11 : vector<16x1xf32> to vector<16x4xf32>
    %102 = arith.divf %100, %101 : vector<16x4xf32>
    %cst_24 = arith.constant 2.000000e+00 : f32
    %103 = vector.broadcast %cst_24 : f32 to vector<16x4xf32>
    %104 = arith.mulf %102, %103 : vector<16x4xf32>
    %c0_25 = arith.constant 0 : index
    %c0_26 = arith.constant 0 : index
    %105 = vector.load %arg3[%c0_25, %c0_26] : memref<16x4xi32, #tpu.memory_space<vmem>>, vector<16x4xi32>
    %c0_i32_27 = arith.constant 0 : i32
    %106 = vector.broadcast %c0_i32_27 : i32 to vector<16x4xi32>
    %107 = arith.cmpi eq, %105, %106 : vector<16x4xi32>
    %c0_i32_28 = arith.constant 0 : i32
    %c64_i32_29 = arith.constant 64 : i32
    %108 = vector.broadcast %c0_i32_28 : i32 to vector<16x4xi32>
    %109 = vector.broadcast %c64_i32_29 : i32 to vector<16x4xi32>
    %110 = arith.select %107, %108, %109 : vector<16x4xi1>, vector<16x4xi32>
    %c0_i32_30 = arith.constant 0 : i32
    %111 = vector.broadcast %c0_i32_30 : i32 to vector<16x4xi32>
    %112 = arith.cmpi eq, %97, %111 : vector<16x4xi32>
    %c64_i32_31 = arith.constant 64 : i32
    %113 = vector.broadcast %c64_i32_31 : i32 to vector<16x4xi32>
    %114 = arith.cmpi eq, %97, %113 : vector<16x4xi32>
    %115 = arith.ori %112, %114 : vector<16x4xi1>
    %116 = arith.select %115, %110, %97 : vector<16x4xi1>, vector<16x4xi32>
    %c0_32 = arith.constant 0 : index
    %c0_33 = arith.constant 0 : index
    %117 = vector.load %arg4[%c0_32, %c0_33] : memref<16x4xi32, #tpu.memory_space<vmem>>, vector<16x4xi32>
    tpu.vector_store %arg4[%c0_32, %c0_33], %116 {strides = array<i32>} : memref<16x4xi32, #tpu.memory_space<vmem>>, vector<16x4xi32>,
    %c0_34 = arith.constant 0 : index
    %c0_35 = arith.constant 0 : index
    %118 = vector.load %arg5[%c0_34, %c0_35] : memref<16x4xf32, #tpu.memory_space<vmem>>, vector<16x4xf32>
    tpu.vector_store %arg5[%c0_34, %c0_35], %104 {strides = array<i32>} : memref<16x4xf32, #tpu.memory_space<vmem>>, vector<16x4xf32>,
    return
  }
  func.func @transform_0(%arg0: i32) -> (i32, i32) {
    %c0_i32 = arith.constant 0 : i32
    %c0_i32_0 = arith.constant 0 : i32
    return %arg0, %c0_i32 : i32, i32
  }
  func.func @transform_1(%arg0: i32) -> (i32, i32) {
    %c0_i32 = arith.constant 0 : i32
    %c0_i32_0 = arith.constant 0 : i32
    %c0_i32_1 = arith.constant 0 : i32
    return %c0_i32, %c0_i32_0 : i32, i32
  }
  func.func @transform_2(%arg0: i32) -> (i32, i32) {
    %c0_i32 = arith.constant 0 : i32
    %c0_i32_0 = arith.constant 0 : i32
    return %arg0, %c0_i32 : i32, i32
  }
  func.func @transform_3(%arg0: i32) -> (i32, i32) {
    %c0_i32 = arith.constant 0 : i32
    %c0_i32_0 = arith.constant 0 : i32
    return %arg0, %c0_i32 : i32, i32
  }
  func.func @transform_4(%arg0: i32) -> (i32, i32) {
    %c0_i32 = arith.constant 0 : i32
    %c0_i32_0 = arith.constant 0 : i32
    return %arg0, %c0_i32 : i32, i32
  }
}

</mosaic_0001>

<llo_original>
// kernel: tpu_custom_call.1
$region0: #{tpu_custom_call.1}
  #allocation0 [shape = 'u32[]', space=smem, size = 0x4, offset = 0x4, fixed_abs, tag = 'smem constant byte address 0x4 - core index']
  #allocation1 [shape = 'u32[72,128]{1,0:T(1,128)}', space=vmem, size = 0x9000, scoped, tag = 'internal scratch']
  %s0 = inlined_call_operand.vmem [shape: f32[16,32], index: 0, kind: input, shape index: {}]
  %s1 = inlined_call_operand.vmem [shape: f32[64,32], index: 1, kind: input, shape index: {}]
  %s2 = inlined_call_operand.vmem [shape: s32[16,4], index: 2, kind: input, shape index: {}]
  %s3 = inlined_call_operand.vmem [shape: s32[16,4], index: 3, kind: output, shape index: {0}]
  %s4 = inlined_call_operand.vmem [shape: f32[16,4], index: 4, kind: output, shape index: {1}]
  %5 = xla_tuple %s3, %s4
  %s6 = sld [smem:[#allocation0]]
  $region30: #{tpu_custom_call.1} parent=0
    _
  %s8 = ssub.s32 1, %s6
  %s9 = scalar_select 0, %s8, %s6
  // Predicated region
  $region2: #{tpu_custom_call.1} parent=0 // pred_check
    _
  $region3: #{tpu_custom_call.1} parent=0 // pred_check_branch
    %11 = sbr.rel (0) target = $region5
  $region4: #{tpu_custom_call.1} parent=0 // pred_region
    _
  $region5: #{tpu_custom_call.1} parent=0 // pred_fallthru
    _
  // Predicated region
  $region6: #{tpu_custom_call.1} parent=0 // pred_check
    _
  $region7: #{tpu_custom_call.1} parent=0 // pred_check_branch
    %13 = sbr.rel (0) target = $region9
  $region8: #{tpu_custom_call.1} parent=0 // pred_region
    _
  $region9: #{tpu_custom_call.1} parent=0 // pred_fallthru
    _
  // Predicated region
  $region10: #{tpu_custom_call.1} parent=0 // pred_check
    _
  $region11: #{tpu_custom_call.1} parent=0 // pred_check_branch
    %15 = sbr.rel (0) target = $region13
  $region12: #{tpu_custom_call.1} parent=0 // pred_region
    _
  $region13: #{tpu_custom_call.1} parent=0 // pred_fallthru
    _
  %v17 = vld [vmem:[%s0] sm:$0xff]
  %v18 = vld [vmem:[%s0 + $0x8] sm:$0xff]
  %v19 = vpack.c.bf16 %v18, %v17
  %v20 = vld [vmem:[%s1] sm:$0xff]
  %v21 = vld [vmem:[%s1 + $0x8] sm:$0xff]
  %v22 = vld [vmem:[%s1 + $0x10] sm:$0xff]
  %v23 = vld [vmem:[%s1 + $0x18] sm:$0xff]
  %v24 = vld [vmem:[%s1 + $0x20] sm:$0xff]
  %v25 = vld [vmem:[%s1 + $0x28] sm:$0xff]
  %v26 = vld [vmem:[%s1 + $0x30] sm:$0xff]
  %v27 = vld [vmem:[%s1 + $0x38] sm:$0xff]
  %v28 = vpack.c.bf16 %v21, %v20
  %v29 = vpack.c.bf16 %v23, %v22
  %v30 = vpack.c.bf16 %v25, %v24
  %v31 = vpack.c.bf16 %v27, %v26
  %vm32 = vcmask 261120
  %v34 = vsel %vm32, %v19, 0
  %v37 = vsel %vm32, %v28, 0
  %v40 = vsel %vm32, %v29, 0
  %v43 = vsel %vm32, %v30, 0
  %v46 = vsel %vm32, %v31, 0
  %48 = vmatpush.bf16.xpose.msra.mxu0 0
  %49 = vmatpush.bf16.xpose.msra.mxu0 0
  %50 = vmatpush.bf16.xpose.msra.mxu0 0
  %51 = vmatpush.bf16.xpose.msra.mxu0 0
  %52 = vmatpush.bf16.xpose.msra.mxu0 %v46
  %53 = vmatpush.bf16.xpose.msra.mxu0 %v43
  %54 = vmatpush.bf16.xpose.msra.mxu0 %v40
  %55 = vmatpush.bf16.xpose.msra.mxu0 %v37
  %56 = vmatmul.bf16.gmra.mxu0 %v34
  %v57 = vpop.f32.mrf.mxu0
  %v58 = vadd.f32 0.0, %v57
  %v59 = vpop.f32.mrf.mxu0
  %v60 = vadd.f32 0.0, %v59
  %61 = vdwg.mxu0
  %vm62 = vcmask 523264
  %v63 = vsel %vm62, %v58, -inf
  %64 = vmax.xlane.f32.xlu0 %v63
  %v65 = vpop.xlane.xlu0 %64
  %v66 = vsel %vm62, %v60, -inf
  %67 = vmax.xlane.f32.xlu0 %v66
  %v68 = vpop.xlane.xlu0 %67
  %v69 = vsub.f32 %v58, %v65
  %v70 = vsub.f32 %v60, %v68
  %v71 = vmul.f32 %v69, 1.442695
  %v72 = vpow.pop %v71
  %v73 = vmul.f32 %v70, 1.442695
  %v74 = vpow.pop %v73
  %v75 = vsel %vm62, %v72, 0.0
  %76 = vadd.xlane.f32.xlu0 %v75
  %v77 = vpop.xlane.xlu0 %76
  %v78 = vsel %vm62, %v74, 0.0
  %79 = vadd.xlane.f32.xlu0 %v78
  %v80 = vpop.xlane.xlu0 %79
  %v81 = vlaneseq
  %v82 = vand.u32 %v81, 127
  %vm83 = vcmp.eq.f32.partialorder %v58, %v65
  %vm84 = vcmp.eq.f32.partialorder %v60, %v68
  %v85 = vsel %vm83, %v82, 64
  %v86 = vsel %vm84, %v82, 64
  %v87 = vsel %vm62, %v85, 2147483647
  %v88 = vand.u32 %v87, 65535
  %v89 = vshra.s32 %v87, 16
  %v90 = vcvt.s32.f32 %v88
  %v91 = vcvt.s32.f32 %v89
  %92 = vmin.xlane.f32.xlu0 %v91
  %v93 = vpop.xlane.xlu0 %92
  %vm94 = vcmp.eq.f32.partialorder %v91, %v93
  %v95 = vsel %vm94, %v90, inf
  %96 = vmin.xlane.f32.xlu0 %v95
  %v97 = vpop.xlane.xlu0 %96
  %v98 = vcvt.f32.s32 %v97
  %v99 = vcvt.f32.s32 %v93
  %v100 = vshll.u32 %v99, 16
  %v101 = vadd.s32 %v100, %v98
  %v102 = vsel %vm62, %v86, 2147483647
  %v103 = vand.u32 %v102, 65535
  %v104 = vshra.s32 %v102, 16
  %v105 = vcvt.s32.f32 %v103
  %v106 = vcvt.s32.f32 %v104
  %107 = vmin.xlane.f32.xlu0 %v106
  %v108 = vpop.xlane.xlu0 %107
  %vm109 = vcmp.eq.f32.partialorder %v106, %v108
  %v110 = vsel %vm109, %v105, inf
  %111 = vmin.xlane.f32.xlu0 %v110
  %v112 = vpop.xlane.xlu0 %111
  %v113 = vcvt.f32.s32 %v112
  %v114 = vcvt.f32.s32 %v108
  %v115 = vshll.u32 %v114, 16
  %v116 = vadd.s32 %v115, %v113
  %vm117 = vcmp.eq.s32.totalorder %v82, 0
  %v118 = vsel %vm117, %v65, 0.0
  %v119 = vsel %vm117, %v68, 0.0
  %v120 = vsel %vm117, %v101, 0
  %v121 = vsel %vm117, %v116, 0
  %vm122 = vcmp.eq.s32.totalorder %v82, %v101
  %vm123 = vcmp.eq.s32.totalorder %v82, %v116
  %v124 = vsel %vm122, -inf, %v58
  %v125 = vsel %vm123, -inf, %v60
  %v126 = vsel %vm62, %v124, -inf
  %127 = vmax.xlane.f32.xlu0 %v126
  %v128 = vpop.xlane.xlu0 %127
  %v129 = vsel %vm62, %v125, -inf
  %130 = vmax.xlane.f32.xlu0 %v129
  %v131 = vpop.xlane.xlu0 %130
  %vm132 = vcmp.eq.f32.partialorder %v124, %v128
  %vm133 = vcmp.eq.f32.partialorder %v125, %v131
  %v134 = vsel %vm132, %v82, 64
  %v135 = vsel %vm133, %v82, 64
  %v136 = vsel %vm62, %v134, 2147483647
  %v137 = vand.u32 %v136, 65535
  %v138 = vshra.s32 %v136, 16
  %v139 = vcvt.s32.f32 %v137
  %v140 = vcvt.s32.f32 %v138
  %141 = vmin.xlane.f32.xlu0 %v140
  %v142 = vpop.xlane.xlu0 %141
  %vm143 = vcmp.eq.f32.partialorder %v140, %v142
  %v144 = vsel %vm143, %v139, inf
  %145 = vmin.xlane.f32.xlu0 %v144
  %v146 = vpop.xlane.xlu0 %145
  %v147 = vcvt.f32.s32 %v146
  %v148 = vcvt.f32.s32 %v142
  %v149 = vshll.u32 %v148, 16
  %v150 = vadd.s32 %v149, %v147
  %v151 = vsel %vm62, %v135, 2147483647
  %v152 = vand.u32 %v151, 65535
  %v153 = vshra.s32 %v151, 16
  %v154 = vcvt.s32.f32 %v152
  %v155 = vcvt.s32.f32 %v153
  %156 = vmin.xlane.f32.xlu0 %v155
  %v157 = vpop.xlane.xlu0 %156
  %vm158 = vcmp.eq.f32.partialorder %v155, %v157
  %v159 = vsel %vm158, %v154, inf
  %160 = vmin.xlane.f32.xlu0 %v159
  %v161 = vpop.xlane.xlu0 %160
  %v162 = vcvt.f32.s32 %v161
  %v163 = vcvt.f32.s32 %v157
  %v164 = vshll.u32 %v163, 16
  %v165 = vadd.s32 %v164, %v162
  %vm166 = vcmp.eq.s32.totalorder %v82, 1
  %v167 = vsel %vm166, %v128, %v118
  %v168 = vsel %vm166, %v131, %v119
  %v169 = vsel %vm166, %v150, %v120
  %v170 = vsel %vm166, %v165, %v121
  %vm171 = vcmp.eq.s32.totalorder %v82, %v150
  %vm172 = vcmp.eq.s32.totalorder %v82, %v165
  %v173 = vsel %vm171, -inf, %v124
  %v174 = vsel %vm172, -inf, %v125
  %v175 = vsel %vm62, %v173, -inf
  %176 = vmax.xlane.f32.xlu0 %v175
  %v177 = vpop.xlane.xlu0 %176
  %v178 = vsel %vm62, %v174, -inf
  %179 = vmax.xlane.f32.xlu0 %v178
  %v180 = vpop.xlane.xlu0 %179
  %vm181 = vcmp.eq.f32.partialorder %v173, %v177
  %vm182 = vcmp.eq.f32.partialorder %v174, %v180
  %v183 = vsel %vm181, %v82, 64
  %v184 = vsel %vm182, %v82, 64
  %v185 = vsel %vm62, %v183, 2147483647
  %v186 = vand.u32 %v185, 65535
  %v187 = vshra.s32 %v185, 16
  %v188 = vcvt.s32.f32 %v186
  %v189 = vcvt.s32.f32 %v187
  %190 = vmin.xlane.f32.xlu0 %v189
  %v191 = vpop.xlane.xlu0 %190
  %vm192 = vcmp.eq.f32.partialorder %v189, %v191
  %v193 = vsel %vm192, %v188, inf
  %194 = vmin.xlane.f32.xlu0 %v193
  %v195 = vpop.xlane.xlu0 %194
  %v196 = vcvt.f32.s32 %v195
  %v197 = vcvt.f32.s32 %v191
  %v198 = vshll.u32 %v197, 16
  %v199 = vadd.s32 %v198, %v196
  %v200 = vsel %vm62, %v184, 2147483647
  %v201 = vand.u32 %v200, 65535
  %v202 = vshra.s32 %v200, 16
  %v203 = vcvt.s32.f32 %v201
  %v204 = vcvt.s32.f32 %v202
  %205 = vmin.xlane.f32.xlu0 %v204
  %v206 = vpop.xlane.xlu0 %205
  %vm207 = vcmp.eq.f32.partialorder %v204, %v206
  %v208 = vsel %vm207, %v203, inf
  %209 = vmin.xlane.f32.xlu0 %v208
  %v210 = vpop.xlane.xlu0 %209
  %v211 = vcvt.f32.s32 %v210
  %v212 = vcvt.f32.s32 %v206
  %v213 = vshll.u32 %v212, 16
  %v214 = vadd.s32 %v213, %v211
  %vm215 = vcmp.eq.s32.totalorder %v82, 2
  %v216 = vsel %vm215, %v177, %v167
  %v217 = vsel %vm215, %v180, %v168
  %v218 = vsel %vm215, %v199, %v169
  %v219 = vsel %vm215, %v214, %v170
  %vm220 = vcmp.eq.s32.totalorder %v82, %v199
  %vm221 = vcmp.eq.s32.totalorder %v82, %v214
  %v222 = vsel %vm220, -inf, %v173
  %v223 = vsel %vm221, -inf, %v174
  %v224 = vsel %vm62, %v222, -inf
  %225 = vmax.xlane.f32.xlu0 %v224
  %v226 = vpop.xlane.xlu0 %225
  %v227 = vsel %vm62, %v223, -inf
  %228 = vmax.xlane.f32.xlu0 %v227
  %v229 = vpop.xlane.xlu0 %228
  %vm230 = vcmp.eq.f32.partialorder %v222, %v226
  %vm231 = vcmp.eq.f32.partialorder %v223, %v229
  %v232 = vsel %vm230, %v82, 64
  %v233 = vsel %vm231, %v82, 64
  %v234 = vsel %vm62, %v232, 2147483647
  %v235 = vand.u32 %v234, 65535
  %v236 = vshra.s32 %v234, 16
  %v237 = vcvt.s32.f32 %v235
  %v238 = vcvt.s32.f32 %v236
  %239 = vmin.xlane.f32.xlu0 %v238
  %v240 = vpop.xlane.xlu0 %239
  %vm241 = vcmp.eq.f32.partialorder %v238, %v240
  %v242 = vsel %vm241, %v237, inf
  %243 = vmin.xlane.f32.xlu0 %v242
  %v244 = vpop.xlane.xlu0 %243
  %v245 = vcvt.f32.s32 %v244
  %v246 = vcvt.f32.s32 %v240
  %v247 = vshll.u32 %v246, 16
  %v248 = vadd.s32 %v247, %v245
  %v249 = vsel %vm62, %v233, 2147483647
  %v250 = vand.u32 %v249, 65535
  %v251 = vshra.s32 %v249, 16
  %v252 = vcvt.s32.f32 %v250
  %v253 = vcvt.s32.f32 %v251
  %254 = vmin.xlane.f32.xlu0 %v253
  %v255 = vpop.xlane.xlu0 %254
  %vm256 = vcmp.eq.f32.partialorder %v253, %v255
  %v257 = vsel %vm256, %v252, inf
  %258 = vmin.xlane.f32.xlu0 %v257
  %v259 = vpop.xlane.xlu0 %258
  %v260 = vcvt.f32.s32 %v259
  %v261 = vcvt.f32.s32 %v255
  %v262 = vshll.u32 %v261, 16
  %v263 = vadd.s32 %v262, %v260
  %vm264 = vcmp.eq.s32.totalorder %v82, 3
  %v265 = vsel %vm264, %v226, %v216
  %v266 = vsel %vm264, %v229, %v217
  %v267 = vsel %vm264, %v248, %v218
  %v268 = vsel %vm264, %v263, %v219
  %v269 = vsub.f32 %v265, %v65
  %v270 = vsub.f32 %v266, %v68
  %v271 = vmul.f32 %v269, 1.442695
  %v272 = vpow.pop %v271
  %v273 = vmul.f32 %v270, 1.442695
  %v274 = vpow.pop %v273
  %v275 = vrcp.pop %v77
  %v276 = vmul.f32 %v77, %v275
  %v277 = vsub.f32 1.0, %v276
  %v278 = vmul.f32 %v275, %v277
  %v279 = vadd.f32 %v275, %v278
  %vm280 = vweird.f32 %v77
  %vm281 = vweird.f32 %v275
  %vm282 = vmor %vm280, %vm281
  %v283 = vsel %vm282, %v275, %v279
  %v284 = vand.u32 2147483647, %v77
  %vm285 = vcmp.eq.f32.partialorder %v284, 8.507059e+37
  %v286 = vand.u32 %v77, 2147483648
  %v287 = vor.u32 1.1754944e-38, %v286
  %v288 = vsel %vm285, %v287, %v283
  %v289 = vmul.f32 %v272, %v288
  %v290 = vrcp.pop %v80
  %v291 = vmul.f32 %v80, %v290
  %v292 = vsub.f32 1.0, %v291
  %v293 = vmul.f32 %v290, %v292
  %v294 = vadd.f32 %v290, %v293
  %vm295 = vweird.f32 %v80
  %vm296 = vweird.f32 %v290
  %vm297 = vmor %vm295, %vm296
  %v298 = vsel %vm297, %v290, %v294
  %v299 = vand.u32 2147483647, %v80
  %vm300 = vcmp.eq.f32.partialorder %v299, 8.507059e+37
  %v301 = vand.u32 %v80, 2147483648
  %v302 = vor.u32 1.1754944e-38, %v301
  %v303 = vsel %vm300, %v302, %v298
  %v304 = vmul.f32 %v274, %v303
  %v305 = vmul.f32 %v289, 2.0
  %v306 = vmul.f32 %v304, 2.0
  %v307 = vld [vmem:[%s2] sm:$0xff]
  %v308 = vld [vmem:[%s2 + $0x8] sm:$0xff]
  %vm309 = vcmp.eq.s32.totalorder %v307, 0
  %vm310 = vcmp.eq.s32.totalorder %v308, 0
  %v311 = vsel %vm309, 0, 64
  %v312 = vsel %vm310, 0, 64
  %vm313 = vcmp.eq.s32.totalorder %v267, 0
  %vm314 = vcmp.eq.s32.totalorder %v268, 0
  %vm315 = vcmp.eq.s32.totalorder %v267, 64
  %vm316 = vcmp.eq.s32.totalorder %v268, 64
  %vm317 = vmor %vm313, %vm315
  %vm318 = vmor %vm314, %vm316
  %v319 = vsel %vm317, %v311, %v267
  %v320 = vsel %vm318, %v312, %v268
  %vm321 = vcmask 31744
  %322 = vst.msk [vmem:[%s3] sm:$0xff] %vm321, %v319
  %323 = vst.msk [vmem:[%s3 + $0x8] sm:$0xff] %vm321, %v320
  %324 = vst.msk [vmem:[%s4] sm:$0xff] %vm321, %v305
  %325 = vst.msk [vmem:[%s4 + $0x8] sm:$0xff] %vm321, %v306
  // Predicated region
  $region14: #{tpu_custom_call.1} parent=0 // pred_check
    _
  $region15: #{tpu_custom_call.1} parent=0 // pred_check_branch
    %327 = sbr.rel (0) target = $region17
  $region16: #{tpu_custom_call.1} parent=0 // pred_region
    _
  $region17: #{tpu_custom_call.1} parent=0 // pred_fallthru
    _
  // Predicated region
  $region18: #{tpu_custom_call.1} parent=0 // pred_check
    _
  $region19: #{tpu_custom_call.1} parent=0 // pred_check_branch
    %329 = sbr.rel (0) target = $region21
  $region20: #{tpu_custom_call.1} parent=0 // pred_region
    _
  $region21: #{tpu_custom_call.1} parent=0 // pred_fallthru
    _
  // Predicated region
  $region22: #{tpu_custom_call.1} parent=0 // pred_check
    _
  $region23: #{tpu_custom_call.1} parent=0 // pred_check_branch
    %331 = sbr.rel (0) target = $region25
  $region24: #{tpu_custom_call.1} parent=0 // pred_region
    _
  $region25: #{tpu_custom_call.1} parent=0 // pred_fallthru
    _
  // Predicated region
  $region26: #{tpu_custom_call.1} parent=0 // pred_check
    _
  $region27: #{tpu_custom_call.1} parent=0 // pred_check_branch
    %333 = sbr.rel (0) target = $region29
  $region28: #{tpu_custom_call.1} parent=0 // pred_region
    _
  $region29: #{tpu_custom_call.1} parent=0 // pred_fallthru
    _

</llo_original>
